<compile_context>
chip_gen: v6e
topology: v6e:2x2x1
jax: 0.10.0
libtpu: 0.0.40
codegen_flags: <defaults>
</compile_context>

<pallas_src>
import math

import jax
import jax.numpy as jnp
from jax.experimental import pallas as pl
from jax.experimental.pallas import tpu as pltpu


# ----------------------------- Pallas kernel -----------------------------

def _add_ones_kernel(x_ref, o_ref):
    # x_ref: (Bt, P,   THW)  params tile (flattened spatial -> lane-dense)
    # o_ref: (Bt, P+1, THW)  output tile: channel 0 = ones, channels 1..P = x
    o_ref[:, 0:1, :] = jnp.ones((o_ref.shape[0], 1, o_ref.shape[2]), o_ref.dtype)
    o_ref[:, 1:, :] = x_ref[...]          # single bulk copy of all P channels


def _largest_divisor_leq(n, cap):
    """Largest divisor of n that is <= cap (always >= 1)."""
    best = 1
    d = 1
    while d * d <= n:
        if n % d == 0:
            if d <= cap:
                best = max(best, d)
            q = n // d
            if q <= cap:
                best = max(best, q)
        d += 1
    return best


def _pick_spatial_tile(hw, per_lane_bytes, target_bytes):
    """Pick a lane-dense spatial tile: a multiple of 128 that divides hw and
    stays within the per-block byte budget; fall back to full extent."""
    if hw % 128 != 0:
        return hw                          # full-extent block is always legal
    best = None
    t = 128
    while t <= hw:
        if hw % t == 0:
            if t * per_lane_bytes <= target_bytes:
                best = t                   # prefer the largest tile that fits
            elif best is None:
                best = t                   # nothing fits -> smallest legal tile
                break
        t += 128
    return best if best is not None else hw


def add_ones_channel(x, *, target_block_bytes=2 << 20):
    """x: (B, P, H, W) -> (B, P+1, H, W) with a leading constant-ones channel."""
    B, P, H, W = x.shape
    HW = H * W
    itemsize = jnp.dtype(x.dtype).itemsize
    x2 = x.reshape(B, P, HW)               # free: contiguous trailing-dim merge

    # Spatial tile (lane dim): full HW for small inputs, 128-aligned divisor otherwise.
    thw = _pick_spatial_tile(HW, (P + 1) * itemsize, target_block_bytes)

    # Batch tile: largest divisor of B whose output block stays under the budget.
    per_batch_block_bytes = (P + 1) * thw * itemsize
    bt = _largest_divisor_leq(
        B, max(1, target_block_bytes // max(1, per_batch_block_bytes)))

    grid = (B // bt, HW // thw)            # (1, 1) for the default tiny shapes

    # TODO(synk): for very large tensors a direct HBM->HBM strided DMA
    # (memory_space=pl.ANY + pltpu.make_async_copy into out[:, 1:, :]) would
    # bypass VMEM/vregs entirely; not needed at these block sizes.
    out2 = pl.pallas_call(
        _add_ones_kernel,
        out_shape=jax.ShapeDtypeStruct((B, P + 1, HW), x.dtype),
        grid=grid,
        in_specs=[pl.BlockSpec((bt, P, thw), lambda b, s: (b, 0, s))],
        out_specs=pl.BlockSpec((bt, P + 1, thw), lambda b, s: (b, 0, s)),
        compiler_params=pltpu.CompilerParams(
            dimension_semantics=("parallel", "parallel")),
    )(x2)
    return out2.reshape(B, P + 1, H, W)


# ------------------------- Module-level Python glue -------------------------

class _OutputDistributionLayer:
    """Minimal deterministic stand-in for the output distribution layer
    (only `params_size` is used by ParallelCNNLayer.__init__)."""

    def __init__(self, params_per_channel=1):
        self._params_per_channel = params_per_channel

    def params_size(self, channels):
        return self._params_per_channel * channels


class ParallelCNNDistribution:
    """Lightweight container matching the PyTorch ParallelCNNDistribution state
    produced by ParallelCNNLayer.forward."""

    def __init__(self, output_distribution_layer, event_shape, base_parallel_nets,
                 upsample_parallel_nets, distribution_params):
        self.output_distribution_layer = output_distribution_layer
        self.num_upsampling_stages = len(upsample_parallel_nets)
        self.distribution_params = distribution_params
        self.base_parallel_nets = base_parallel_nets
        self.upsample_parallel_nets = upsample_parallel_nets
        self.event_shape = event_shape

    # TODO(synk): log_prob / sample require plt_unet.UNet forward passes whose
    # architecture is not provided in the reference module; not implemented here.


class ParallelCNNLayer:
    def __init__(self, event_shape, output_distribution_layer, num_upsampling_stages,
                 max_unet_layers=3, params_size=1, add_ones=True, batch=True):
        base_width = event_shape[1] / 2 ** num_upsampling_stages
        num_distribution_params = output_distribution_layer.params_size(1)
        unet_num_layers = int(min(math.log(base_width) + 1, max_unet_layers))
        input_channels = params_size + event_shape[0]
        if add_ones:
            input_channels += 1

        # TODO(synk): plt_unet.UNet is an external dependency whose layer shapes are
        # not given; we record the (out_channels, in_channels, num_layers) metadata
        # deterministically instead of materializing UNet weights.
        self.base_nets = [
            dict(num_classes=num_distribution_params,
                 input_channels=input_channels,
                 num_layers=unet_num_layers)
            for _ in range(event_shape[0])
        ]
        upsampler_nets = []
        for l in range(num_upsampling_stages):
            output_width = base_width * 2 ** (l + 1)
            lvl_layers = int(min(math.log(output_width) + 1, max_unet_layers))
            upsampler_nets.append([
                [dict(num_classes=num_distribution_params,
                      input_channels=input_channels,
                      num_layers=lvl_layers)
                 for _ in range(event_shape[0])]
                for _ in range(3)
            ])

        self.num_upsampling_stages = num_upsampling_stages
        self.output_distribution_layer = output_distribution_layer
        self.upsampler_nets = upsampler_nets
        self.event_shape = event_shape
        self.params_size = params_size
        self.add_ones = add_ones
        self.batch = batch  # (batch-norm deletion only affects the UNet internals)

    def forward(self, x):
        if x.shape[1] != self.params_size:
            raise RuntimeError(
                'distribution_params has channel size {}, but should be {}'.format(
                    x.shape[1], self.params_size))
        if self.add_ones:
            # Pallas kernel: cat([ones, x], dim=1).
            # TODO(synk): when the downstream UNet conv is available, folding the
            # ones channel into that conv's bias would avoid materializing it.
            x = add_ones_channel(x)
        return ParallelCNNDistribution(self.output_distribution_layer, self.event_shape,
                                       self.base_nets, self.upsampler_nets, x)

    def __call__(self, x):
        return self.forward(x)


# --------------------------------- main ---------------------------------

if __name__ == "__main__":
    key = jax.random.PRNGKey(0)

    # Small shapes consistent with the module:
    #   event_shape = (C, H, W) = (4, 16, 16), params_size = 1, batch = 2
    batch_size = 2
    params_size = 1
    event_shape = (4, 16, 16)
    num_upsampling_stages = 2

    layer = ParallelCNNLayer(
        event_shape=event_shape,
        output_distribution_layer=_OutputDistributionLayer(params_per_channel=1),
        num_upsampling_stages=num_upsampling_stages,
        max_unet_layers=3,
        params_size=params_size,
        add_ones=True,
        batch=True,
    )

    x = jax.random.normal(key, (batch_size, params_size, event_shape[1], event_shape[2]),
                          dtype=jnp.float32)

    dist = layer(x)
    params = jax.block_until_ready(dist.distribution_params)

    # Correctness checks against the reference semantics: cat([ones, x], dim=1).
    assert params.shape == (batch_size, params_size + 1, event_shape[1], event_shape[2])
    assert bool(jnp.all(params[:, 0] == 1.0))
    assert bool(jnp.allclose(params[:, 1:], x))
    assert dist.num_upsampling_stages == num_upsampling_stages
    assert dist.event_shape == event_shape

    print("KERNEL_OK")
</pallas_src>

<mosaic_0001>
module attributes {stable_mosaic.version = 11 : i64} {
  func.func @_add_ones_kernel(%arg0: i32, %arg1: i32, %arg2: memref<2x1x256xf32, #tpu.memory_space<vmem>>, %arg3: memref<2x2x256xf32, #tpu.memory_space<vmem>>) attributes {dimension_semantics = [#tpu.dimension_semantics<parallel>, #tpu.dimension_semantics<parallel>], iteration_bounds = array<i64: 1, 1>, scalar_prefetch = 0 : i64, scratch_operands = 0 : i64, tpu.core_type = #tpu.core_type<tc>, window_params = [{transform_indices = @transform_0, window_bounds = array<i64: 2, 1, 256>}, {transform_indices = @transform_1, window_bounds = array<i64: 2, 2, 256>}]} {
    %cst = arith.constant 1.000000e+00 : f32
    %0 = vector.broadcast %cst : f32 to vector<2x1x256xf32>
    %c0 = arith.constant 0 : index
    %c0_0 = arith.constant 0 : index
    %c0_1 = arith.constant 0 : index
    %1 = vector.load %arg3[%c0, %c0_0, %c0_1] : memref<2x2x256xf32, #tpu.memory_space<vmem>>, vector<2x1x256xf32>
    tpu.vector_store %arg3[%c0, %c0_0, %c0_1], %0 {strides = array<i32>} : memref<2x2x256xf32, #tpu.memory_space<vmem>>, vector<2x1x256xf32>,
    %c0_2 = arith.constant 0 : index
    %c0_3 = arith.constant 0 : index
    %c0_4 = arith.constant 0 : index
    %2 = vector.load %arg2[%c0_2, %c0_3, %c0_4] : memref<2x1x256xf32, #tpu.memory_space<vmem>>, vector<2x1x256xf32>
    %c0_5 = arith.constant 0 : index
    %c1 = arith.constant 1 : index
    %c0_6 = arith.constant 0 : index
    %3 = vector.load %arg3[%c0_5, %c1, %c0_6] : memref<2x2x256xf32, #tpu.memory_space<vmem>>, vector<2x1x256xf32>
    tpu.vector_store %arg3[%c0_5, %c1, %c0_6], %2 {strides = array<i32>} : memref<2x2x256xf32, #tpu.memory_space<vmem>>, vector<2x1x256xf32>,
    return
  }
  func.func @transform_0(%arg0: i32, %arg1: i32) -> (i32, i32, i32) {
    %c0_i32 = arith.constant 0 : i32
    %c0_i32_0 = arith.constant 0 : i32
    return %arg0, %c0_i32, %arg1 : i32, i32, i32
  }
  func.func @transform_1(%arg0: i32, %arg1: i32) -> (i32, i32, i32) {
    %c0_i32 = arith.constant 0 : i32
    %c0_i32_0 = arith.constant 0 : i32
    return %arg0, %c0_i32, %arg1 : i32, i32, i32
  }
}

</mosaic_0001>

<llo_original>
// kernel: tpu_custom_call.1
$region0: #{tpu_custom_call.1}
  #allocation0 [shape = 'u32[]', space=smem, size = 0x4, offset = 0x4, fixed_abs, tag = 'smem constant byte address 0x4 - core index']
  #allocation1 [shape = 'u32[144,128]{1,0:T(1,128)}', space=vmem, size = 0x12000, scoped, tag = 'internal scratch']
  %s0 = inlined_call_operand.hbm [shape: f32[2,1,256], index: 0, kind: input, shape index: {}]
  %s1 = inlined_call_operand.hbm [shape: f32[2,2,256], index: 1, kind: output, shape index: {}]
  %s2 = sld [smem:[#allocation0]]
  $region18: #{tpu_custom_call.1} parent=0
    _
  %s4 = ssub.s32 1, %s2
  %s5 = scalar_select 0, %s4, %s2
  $region1: #{tpu_custom_call.1} parent=0
    #allocation2 [shape = 'u8[2048]{0}', space=vmem, size = 0x800, scoped, tag = 'input window, operand 0, single buffered']
    #allocation3 [shape = 's32[1]{0}', space=sflag, size = 0x4, scoped, tag = 'scoped memory for tpu_custom_call.1']
    #allocation4 [shape = 's32[1]{0}', space=sflag, size = 0x4, scoped, tag = 'scoped memory for tpu_custom_call.1']
    #allocation5 [shape = 'u8[4096]{0}', space=vmem, size = 0x1000, scoped, tag = 'output window, operand 0, single buffered']
    %6 = vsyncpa [#allocation3], 0
    %7 = vsyncpa [#allocation4], 0
    // Predicated region
    $region2: #{tpu_custom_call.1} parent=1 // pred_check
      _
    $region3: #{tpu_custom_call.1} parent=1 // pred_check_branch
      %9 = sbr.rel (0) target = $region5
    $region4: #{tpu_custom_call.1} parent=1 // pred_region
      %s11 = ssub.s32 64, 64
      %12 = vsyncadd [#allocation3], %s11
      %s13 = sshll.u32 [#allocation2], 4
      %s14 = int_to_ptr.vmem [resolvable:$true] %s13
      %19 = dma.hbm_to_vmem [thread:$0]  %s0, 64, %s14, [#allocation3], 32, 32, 2
    $region5: #{tpu_custom_call.1} parent=1 // pred_fallthru
      _
    // Predicated region
    $region6: #{tpu_custom_call.1} parent=1 // pred_check
      _
    $region7: #{tpu_custom_call.1} parent=1 // pred_check_branch
      %21 = sbr.rel (0) target = $region9
    $region8: #{tpu_custom_call.1} parent=1 // pred_region
      %22 = dma.done [#allocation3], 64
    $region9: #{tpu_custom_call.1} parent=1 // pred_fallthru
      _
    %v23 = vlaneseq
    %vm24 = vcmp.ge.s32.totalorder %v23, 0
    %vm25 = vcmp.lt.s32.totalorder %v23, 256
    %vm26 = vmand %vm24, %vm25
    %27 = vst.msk [vmem:[#allocation5] ss:$2 sm:$0x3] %vm26, 1.0
    %s28 = scalar_lea.vmem [#allocation5], 4
    %29 = vst.msk [vmem:[%s28] ss:$2 sm:$0x3] %vm26, 1.0
    %v30 = vld [vmem:[#allocation2] sm:$0x3]
    %v31 = vld [vmem:[#allocation2 + $0x2] sm:$0x3]
    %s32 = scalar_lea.vmem [#allocation5], 1
    %33 = vst.msk [vmem:[%s32] ss:$2 sm:$0x3] %vm26, %v30
    %s34 = scalar_lea.vmem [#allocation5], 5
    %35 = vst.msk [vmem:[%s34] ss:$2 sm:$0x3] %vm26, %v31
    // Predicated region
    $region10: #{tpu_custom_call.1} parent=1 // pred_check
      _
    $region11: #{tpu_custom_call.1} parent=1 // pred_check_branch
      %37 = sbr.rel (0) target = $region13
    $region12: #{tpu_custom_call.1} parent=1 // pred_region
      %s39 = ssub.s32 128, 128
      %40 = vsyncadd [#allocation4], %s39
      %s41 = sshll.u32 [#allocation5], 4
      %s42 = int_to_ptr.vmem [resolvable:$true] %s41
      %47 = dma.vmem_to_hbm [thread:$0]  %s42, 128, %s1, [#allocation4], 64, 64, 4
    $region13: #{tpu_custom_call.1} parent=1 // pred_fallthru
      _
    // Predicated region
    $region14: #{tpu_custom_call.1} parent=1 // pred_check
      _
    $region15: #{tpu_custom_call.1} parent=1 // pred_check_branch
      %49 = sbr.rel (0) target = $region17
    $region16: #{tpu_custom_call.1} parent=1 // pred_region
      %50 = dma.done [#allocation4], 128
    $region17: #{tpu_custom_call.1} parent=1 // pred_fallthru
      _
    %51 = vsyncpa [#allocation3], 1
    %52 = vsyncpa [#allocation4], 1

</llo_original>
